<compile_context>
chip_gen: v6e
topology: v6e:2x2x1
jax: 0.10.0
libtpu: 0.0.40
codegen_flags: <defaults>
</compile_context>

<pallas_src>
import functools

import jax
import jax.numpy as jnp
from jax.experimental import pallas as pl
from jax.experimental.pallas import tpu as pltpu


# ---------------------------------------------------------------------------
# Pallas kernel: fused 3-layer MLP over one batch tile (all f32, MXU matmuls).
# ---------------------------------------------------------------------------
def _dqn_mlp_kernel(x_ref, w1_ref, b1_ref, w2_ref, b2_ref, w3_ref, b3_ref, o_ref):
    x = x_ref[...]                                                     # [TB, S]  f32
    h1 = jnp.dot(x, w1_ref[...], preferred_element_type=jnp.float32)   # [TB, 64]
    h1 = jnp.maximum(h1 + b1_ref[...], 0.0)                            # ReLU(fc1)
    h2 = jnp.dot(h1, w2_ref[...], preferred_element_type=jnp.float32)  # [TB, 64]
    h2 = jnp.maximum(h2 + b2_ref[...], 0.0)                            # ReLU(fc2)
    out = jnp.dot(h2, w3_ref[...], preferred_element_type=jnp.float32) # [TB, out]
    o_ref[...] = (out + b3_ref[...]).astype(o_ref.dtype)               # unpadded store


def _cdiv(a, b):
    return -(-a // b)


def _round_up(n, m):
    return _cdiv(n, m) * m


def _choose_batch_tiling(batch, tb_max, min_tiles):
    """Pick a sublane-aligned tile size tb and padded batch b_pad = n_tiles*tb.

    Guarantees: tb % 8 == 0, tb <= tb_max, b_pad - batch < n_tiles*8 + 8
    (tight padding), and n_tiles >= min_tiles whenever batch allows (>=2 tiles
    lets v7x's two TensorCores split the grid).
    """
    b8 = _round_up(max(batch, 1), 8)
    max_tiles = b8 // 8
    n_tiles = min(max(min_tiles, _cdiv(b8, tb_max)), max_tiles)
    tb = min(_round_up(_cdiv(b8, n_tiles), 8), tb_max)
    n_tiles = _cdiv(b8, tb)
    return tb, n_tiles * tb


# ---------------------------------------------------------------------------
# Wrapper: batch tiling + megacore; weights stay VMEM-resident across tiles.
# ---------------------------------------------------------------------------
@functools.partial(jax.jit, static_argnames=("tb_max", "min_tiles"))
def dqn_forward(x, w1, b1, w2, b2, w3, b3, *, tb_max=2048, min_tiles=2):
    """x: [B, state_dim] f32; wi: [in, out] f32; bi: [1, out] f32 -> [B, outDim] f32."""
    B, S = x.shape
    H = w1.shape[1]
    out_dim = w3.shape[1]

    tb, b_pad = _choose_batch_tiling(B, tb_max, min_tiles)
    if b_pad != B:
        x = jnp.pad(x, ((0, b_pad - B), (0, 0)))
    grid = (b_pad // tb,)

    flops = 2 * b_pad * (S * H + H * H + H * out_dim)
    bytes_accessed = 4 * (b_pad * S                       # x in
                          + S * H + H * H + H * out_dim   # weights (read once)
                          + 2 * H + out_dim               # biases
                          + b_pad * out_dim)              # unpadded output

    out = pl.pallas_call(
        _dqn_mlp_kernel,
        out_shape=jax.ShapeDtypeStruct((b_pad, out_dim), jnp.float32),
        grid=grid,
        in_specs=[
            pl.BlockSpec((tb, S), lambda i: (i, 0)),          # x: streams per tile
            pl.BlockSpec((S, H), lambda i: (0, 0)),           # w1: VMEM-resident
            pl.BlockSpec((1, H), lambda i: (0, 0)),           # b1
            pl.BlockSpec((H, H), lambda i: (0, 0)),           # w2
            pl.BlockSpec((1, H), lambda i: (0, 0)),           # b2
            pl.BlockSpec((H, out_dim), lambda i: (0, 0)),     # w3 (unpadded)
            pl.BlockSpec((1, out_dim), lambda i: (0, 0)),     # b3 (unpadded)
        ],
        out_specs=pl.BlockSpec((tb, out_dim), lambda i: (i, 0)),   # exact-width writeback
        compiler_params=pltpu.CompilerParams(
            dimension_semantics=("parallel",)),               # v7x: 2 TCs split batch tiles
        cost_estimate=pl.CostEstimate(
            flops=flops, transcendentals=0, bytes_accessed=bytes_accessed),
    )(x, w1, b1, w2, b2, w3, b3)

    # Row slice only when padding was added (common batch sizes take the
    # no-copy path); columns are already exact.
    return out if b_pad == B else out[:B]


# ---------------------------------------------------------------------------
# Deterministic parameter init (mirrors torch.nn.init.orthogonal_, gain=1,
# and constant_(bias, 0)).  Weight is created as [out, in] then transposed.
# ---------------------------------------------------------------------------
def orthogonal(key, out_features, in_features, dtype=jnp.float32):
    rows, cols = out_features, in_features
    flat = jax.random.normal(key, (rows, cols), dtype=jnp.float32)
    if rows < cols:
        flat = flat.T
    q, r = jnp.linalg.qr(flat)
    d = jnp.sign(jnp.diagonal(r))
    d = jnp.where(d == 0, 1.0, d)               # guard against exact-zero diagonal
    q = q * d[None, :]
    if rows < cols:
        q = q.T
    return q.astype(dtype)                      # [out, in]


def init_params(key, state_dim, hidden, out_dim):
    k1, k2, k3 = jax.random.split(key, 3)
    w1 = orthogonal(k1, hidden, state_dim).T    # -> [state_dim, 64]
    w2 = orthogonal(k2, hidden, hidden).T       # -> [64, 64]
    w3 = orthogonal(k3, out_dim, hidden).T      # -> [64, outDim]
    b1 = jnp.zeros((1, hidden), jnp.float32)
    b2 = jnp.zeros((1, hidden), jnp.float32)
    b3 = jnp.zeros((1, out_dim), jnp.float32)
    return w1, b1, w2, b2, w3, b3


# ---------------------------------------------------------------------------
# Pure-JAX reference for correctness check (highest-precision matmuls).
# ---------------------------------------------------------------------------
def dqn_forward_ref(x, w1, b1, w2, b2, w3, b3):
    hp = jax.lax.Precision.HIGHEST
    h1 = jax.nn.relu(jnp.dot(x, w1, precision=hp) + b1)
    h2 = jax.nn.relu(jnp.dot(h1, w2, precision=hp) + b2)
    return jnp.dot(h2, w3, precision=hp) + b3


if __name__ == "__main__":
    # Second-order-integrator env: small state / discrete action grid.
    STATE_DIM = 4     # e.g. [e_pos, e_vel, pos, vel]
    HIDDEN = 64
    OUT_DIM = 11      # np.prod(env.action_num), <= 100

    key = jax.random.PRNGKey(0)
    kx, kp = jax.random.split(key)
    params = init_params(kp, STATE_DIM, HIDDEN, OUT_DIM)

    # Batched (replay-buffer style) call: exercises a 2-tile grid, no padding.
    BATCH = 64
    x = jax.random.normal(kx, (BATCH, STATE_DIM), dtype=jnp.float32)
    q_vals = jax.block_until_ready(dqn_forward(x, *params))
    assert q_vals.shape == (BATCH, OUT_DIM)
    ref = dqn_forward_ref(x, *params)
    assert jnp.allclose(q_vals, ref, atol=2e-3, rtol=2e-3), "mismatch vs f32 reference"

    # Ragged batch: exercises the row-padding + row-slice path.
    x_small = jax.random.normal(jax.random.PRNGKey(1), (5, STATE_DIM), dtype=jnp.float32)
    q_small = jax.block_until_ready(dqn_forward(x_small, *params))
    assert q_small.shape == (5, OUT_DIM)
    assert jnp.allclose(q_small, dqn_forward_ref(x_small, *params),
                        atol=2e-3, rtol=2e-3), "mismatch vs f32 reference (small batch)"

    # TODO(synk): for single-env-step action selection, fuse epsilon-greedy
    # argmax into the kernel so each tile writes a [tb] int32 action instead of
    # Q-values (removes the remaining output writeback + separate argmax launch);
    # forward() itself must keep returning Q-values to match the PyTorch module.
    print("KERNEL_OK")
</pallas_src>

<mosaic_0001>
module attributes {stable_mosaic.version = 11 : i64} {
  func.func @_dqn_mlp_kernel(%arg0: i32, %arg1: memref<32x4xf32, #tpu.memory_space<vmem>>, %arg2: memref<4x64xf32, #tpu.memory_space<vmem>>, %arg3: memref<1x64xf32, #tpu.memory_space<vmem>>, %arg4: memref<64x64xf32, #tpu.memory_space<vmem>>, %arg5: memref<1x64xf32, #tpu.memory_space<vmem>>, %arg6: memref<64x11xf32, #tpu.memory_space<vmem>>, %arg7: memref<1x11xf32, #tpu.memory_space<vmem>>, %arg8: memref<32x11xf32, #tpu.memory_space<vmem>>) attributes {dimension_semantics = [#tpu.dimension_semantics<parallel>], iteration_bounds = array<i64: 2>, scalar_prefetch = 0 : i64, scratch_operands = 0 : i64, tpu.core_type = #tpu.core_type<tc>, window_params = [{transform_indices = @transform_0, window_bounds = array<i64: 32, 4>}, {pipeline_mode = #tpu.pipeline_mode<synchronous>, transform_indices = @transform_1, window_bounds = array<i64: 4, 64>}, {pipeline_mode = #tpu.pipeline_mode<synchronous>, transform_indices = @transform_2, window_bounds = array<i64: 1, 64>}, {pipeline_mode = #tpu.pipeline_mode<synchronous>, transform_indices = @transform_3, window_bounds = array<i64: 64, 64>}, {pipeline_mode = #tpu.pipeline_mode<synchronous>, transform_indices = @transform_4, window_bounds = array<i64: 1, 64>}, {pipeline_mode = #tpu.pipeline_mode<synchronous>, transform_indices = @transform_5, window_bounds = array<i64: 64, 11>}, {pipeline_mode = #tpu.pipeline_mode<synchronous>, transform_indices = @transform_6, window_bounds = array<i64: 1, 11>}, {transform_indices = @transform_7, window_bounds = array<i64: 32, 11>}]} {
    %c0 = arith.constant 0 : index
    %c0_0 = arith.constant 0 : index
    %0 = vector.load %arg1[%c0, %c0_0] : memref<32x4xf32, #tpu.memory_space<vmem>>, vector<32x4xf32>
    %c0_1 = arith.constant 0 : index
    %c0_2 = arith.constant 0 : index
    %1 = vector.load %arg2[%c0_1, %c0_2] : memref<4x64xf32, #tpu.memory_space<vmem>>, vector<4x64xf32>
    %cst = arith.constant dense<0.000000e+00> : vector<32x64xf32>
    %2 = tpu.matmul %0, %1, %cst {dimension_numbers = #tpu.dot_dimension_numbers<[1], [0], [0], [1], [0, 0, 1, 1], [], []>} : vector<32x4xf32>, vector<4x64xf32>, vector<32x64xf32> -> vector<32x64xf32>
    %c0_3 = arith.constant 0 : index
    %c0_4 = arith.constant 0 : index
    %3 = vector.load %arg3[%c0_3, %c0_4] : memref<1x64xf32, #tpu.memory_space<vmem>>, vector<1x64xf32>
    %4 = vector.broadcast %3 : vector<1x64xf32> to vector<32x64xf32>
    %5 = arith.addf %2, %4 : vector<32x64xf32>
    %cst_5 = arith.constant 0.000000e+00 : f32
    %6 = vector.broadcast %cst_5 : f32 to vector<32x64xf32>
    %7 = arith.maximumf %5, %6 : vector<32x64xf32>
    %c0_6 = arith.constant 0 : index
    %c0_7 = arith.constant 0 : index
    %8 = vector.load %arg4[%c0_6, %c0_7] : memref<64x64xf32, #tpu.memory_space<vmem>>, vector<64x64xf32>
    %cst_8 = arith.constant dense<0.000000e+00> : vector<32x64xf32>
    %9 = tpu.matmul %7, %8, %cst_8 {dimension_numbers = #tpu.dot_dimension_numbers<[1], [0], [0], [1], [0, 0, 1, 1], [], []>} : vector<32x64xf32>, vector<64x64xf32>, vector<32x64xf32> -> vector<32x64xf32>
    %c0_9 = arith.constant 0 : index
    %c0_10 = arith.constant 0 : index
    %10 = vector.load %arg5[%c0_9, %c0_10] : memref<1x64xf32, #tpu.memory_space<vmem>>, vector<1x64xf32>
    %11 = vector.broadcast %10 : vector<1x64xf32> to vector<32x64xf32>
    %12 = arith.addf %9, %11 : vector<32x64xf32>
    %cst_11 = arith.constant 0.000000e+00 : f32
    %13 = vector.broadcast %cst_11 : f32 to vector<32x64xf32>
    %14 = arith.maximumf %12, %13 : vector<32x64xf32>
    %c0_12 = arith.constant 0 : index
    %c0_13 = arith.constant 0 : index
    %15 = vector.load %arg6[%c0_12, %c0_13] : memref<64x11xf32, #tpu.memory_space<vmem>>, vector<64x11xf32>
    %cst_14 = arith.constant dense<0.000000e+00> : vector<32x11xf32>
    %16 = tpu.matmul %14, %15, %cst_14 {dimension_numbers = #tpu.dot_dimension_numbers<[1], [0], [0], [1], [0, 0, 1, 1], [], []>} : vector<32x64xf32>, vector<64x11xf32>, vector<32x11xf32> -> vector<32x11xf32>
    %c0_15 = arith.constant 0 : index
    %c0_16 = arith.constant 0 : index
    %17 = vector.load %arg7[%c0_15, %c0_16] : memref<1x11xf32, #tpu.memory_space<vmem>>, vector<1x11xf32>
    %18 = vector.broadcast %17 : vector<1x11xf32> to vector<32x11xf32>
    %19 = arith.addf %16, %18 : vector<32x11xf32>
    %c0_17 = arith.constant 0 : index
    %c0_18 = arith.constant 0 : index
    %20 = vector.load %arg8[%c0_17, %c0_18] : memref<32x11xf32, #tpu.memory_space<vmem>>, vector<32x11xf32>
    tpu.vector_store %arg8[%c0_17, %c0_18], %19 {strides = array<i32>} : memref<32x11xf32, #tpu.memory_space<vmem>>, vector<32x11xf32>,
    return
  }
  func.func @transform_0(%arg0: i32) -> (i32, i32) {
    %c0_i32 = arith.constant 0 : i32
    %c0_i32_0 = arith.constant 0 : i32
    return %arg0, %c0_i32 : i32, i32
  }
  func.func @transform_1(%arg0: i32) -> (i32, i32) {
    %c0_i32 = arith.constant 0 : i32
    %c0_i32_0 = arith.constant 0 : i32
    %c0_i32_1 = arith.constant 0 : i32
    return %c0_i32, %c0_i32_0 : i32, i32
  }
  func.func @transform_2(%arg0: i32) -> (i32, i32) {
    %c0_i32 = arith.constant 0 : i32
    %c0_i32_0 = arith.constant 0 : i32
    %c0_i32_1 = arith.constant 0 : i32
    return %c0_i32, %c0_i32_0 : i32, i32
  }
  func.func @transform_3(%arg0: i32) -> (i32, i32) {
    %c0_i32 = arith.constant 0 : i32
    %c0_i32_0 = arith.constant 0 : i32
    %c0_i32_1 = arith.constant 0 : i32
    return %c0_i32, %c0_i32_0 : i32, i32
  }
  func.func @transform_4(%arg0: i32) -> (i32, i32) {
    %c0_i32 = arith.constant 0 : i32
    %c0_i32_0 = arith.constant 0 : i32
    %c0_i32_1 = arith.constant 0 : i32
    return %c0_i32, %c0_i32_0 : i32, i32
  }
  func.func @transform_5(%arg0: i32) -> (i32, i32) {
    %c0_i32 = arith.constant 0 : i32
    %c0_i32_0 = arith.constant 0 : i32
    %c0_i32_1 = arith.constant 0 : i32
    return %c0_i32, %c0_i32_0 : i32, i32
  }
  func.func @transform_6(%arg0: i32) -> (i32, i32) {
    %c0_i32 = arith.constant 0 : i32
    %c0_i32_0 = arith.constant 0 : i32
    %c0_i32_1 = arith.constant 0 : i32
    return %c0_i32, %c0_i32_0 : i32, i32
  }
  func.func @transform_7(%arg0: i32) -> (i32, i32) {
    %c0_i32 = arith.constant 0 : i32
    %c0_i32_0 = arith.constant 0 : i32
    return %arg0, %c0_i32 : i32, i32
  }
}

</mosaic_0001>

<llo_original>
// kernel: dqn_forward.1
$region0: #{dqn_forward.1}
  #allocation0 [shape = 'u32[]', space=smem, size = 0x4, offset = 0x4, fixed_abs, tag = 'smem constant byte address 0x4 - core index']
  #allocation1 [shape = 'u32[144,128]{1,0:T(1,128)}', space=vmem, size = 0x12000, scoped, tag = 'internal scratch']
  %s0 = inlined_call_operand.vmem [shape: f32[64,4], index: 0, kind: input, shape index: {}]
  %s1 = inlined_call_operand.vmem [shape: f32[4,64], index: 1, kind: input, shape index: {}]
  %s2 = inlined_call_operand.vmem [shape: f32[1,64], index: 2, kind: input, shape index: {}]
  %s3 = inlined_call_operand.vmem [shape: f32[64,64], index: 3, kind: input, shape index: {}]
  %s4 = inlined_call_operand.vmem [shape: f32[1,64], index: 4, kind: input, shape index: {}]
  %s5 = inlined_call_operand.vmem [shape: f32[64,11], index: 5, kind: input, shape index: {}]
  %s6 = inlined_call_operand.vmem [shape: f32[1,11], index: 6, kind: input, shape index: {}]
  %s7 = inlined_call_operand.vmem [shape: f32[64,11], index: 7, kind: output, shape index: {}]
  %s8 = sld [smem:[#allocation0]]
  $region61: #{dqn_forward.1} parent=0
    _
  %s10 = ssub.s32 1, %s8
  %s11 = scalar_select 0, %s10, %s8
  loop: start=0, step=1, limit=4
  $region2: #{dqn_forward.1} parent=0 // loop_pre_header
    _
  $region3: #{dqn_forward.1} parent=0 // loop_header
    %s13 = sphi 0, %s17
    %p14 = scmp.ge.s32.totalorder %s13, 4
    %s23 = sphi 0, %s25
    %s26 = sphi 0, %s23
    %s27 = sphi 0, %s26
    %s43 = sphi 0, %s27
    %s47 = sphi 0, %s47
    %s49 = sphi 0, %s47
    %s50 = sphi 0, %s49
    %s64 = sphi 0, %s50
    %s68 = sphi 0, %s68
    %s70 = sphi 0, %s68
    %s71 = sphi 0, %s70
    %s85 = sphi 0, %s71
    %s89 = sphi 0, %s89
    %s91 = sphi 0, %s89
    %s92 = sphi 0, %s91
    %s106 = sphi 0, %s92
    %s110 = sphi 0, %s110
    %s112 = sphi 0, %s110
    %s113 = sphi 0, %s112
    %s127 = sphi 0, %s113
    %s131 = sphi 0, %s131
    %s133 = sphi 0, %s131
    %s134 = sphi 0, %s133
    %s148 = sphi 0, %s134
    %s152 = sphi 0, %s152
    %s154 = sphi 0, %s152
    %s155 = sphi 0, %s154
    %s169 = sphi 0, %s155
    %s175 = sphi 0, %s177
    %s178 = sphi 0, %s175
    %s179 = sphi 0, %s178
    %s195 = sphi 0, %s179
  $region4: #{dqn_forward.1} parent=0 // loop_header_branch
    %16 = sbr.rel (%p14) target = $region8
  $region5: #{dqn_forward.1} parent=0 // loop_body
    %s18 = ssub.s32 %s13, 1
    %s19 = ssub.s32 %s13, 2
    %s20 = sadd.s32 %s13, 1
    %s21 = ssub.s32 %s13, %s20
    %p22 = scmp.eq.s32.totalorder %s21, 0
    %s24 = sadd.s32 %s23, 1
    %s25 = scalar_select %p22, %s23, %s24
    %p28 = pneg %p22
    %p29 = scmp.eq.s32.totalorder %s13, 1
    %p30 = por %p28, %p29
    %p31 = scmp.ne.s32.totalorder %s23, %s26
    %p32 = scmp.eq.s32.totalorder %s13, 0
    %p33 = por %p31, %p32
    %p34 = scmp.ne.s32.totalorder %s23, %s26
    %p35 = scmp.eq.s32.totalorder %s18, 1
    %p36 = por %p34, %p35
    %p37 = scmp.ne.s32.totalorder %s26, %s27
    %p38 = scmp.eq.s32.totalorder %s18, 0
    %p39 = por %p37, %p38
    %p40 = scmp.ne.s32.totalorder %s26, %s27
    %p41 = scmp.eq.s32.totalorder %s19, 1
    %p42 = por %p40, %p41
    %p44 = scmp.ne.s32.totalorder %s27, %s43
    %p45 = scmp.eq.s32.totalorder %s19, 0
    %p46 = por %p44, %p45
    %s48 = sadd.s32 %s47, 1
    %p51 = scmp.eq.s32.totalorder %s13, 1
    %p52 = scmp.ne.s32.totalorder %s47, %s49
    %p53 = scmp.eq.s32.totalorder %s13, 0
    %p54 = por %p52, %p53
    %p55 = scmp.ne.s32.totalorder %s47, %s49
    %p56 = scmp.eq.s32.totalorder %s18, 1
    %p57 = por %p55, %p56
    %p58 = scmp.ne.s32.totalorder %s49, %s50
    %p59 = scmp.eq.s32.totalorder %s18, 0
    %p60 = por %p58, %p59
    %p61 = scmp.ne.s32.totalorder %s49, %s50
    %p62 = scmp.eq.s32.totalorder %s19, 1
    %p63 = por %p61, %p62
    %p65 = scmp.ne.s32.totalorder %s50, %s64
    %p66 = scmp.eq.s32.totalorder %s19, 0
    %p67 = por %p65, %p66
    %s69 = sadd.s32 %s68, 1
    %p72 = scmp.eq.s32.totalorder %s13, 1
    %p73 = scmp.ne.s32.totalorder %s68, %s70
    %p74 = scmp.eq.s32.totalorder %s13, 0
    %p75 = por %p73, %p74
    %p76 = scmp.ne.s32.totalorder %s68, %s70
    %p77 = scmp.eq.s32.totalorder %s18, 1
    %p78 = por %p76, %p77
    %p79 = scmp.ne.s32.totalorder %s70, %s71
    %p80 = scmp.eq.s32.totalorder %s18, 0
    %p81 = por %p79, %p80
    %p82 = scmp.ne.s32.totalorder %s70, %s71
    %p83 = scmp.eq.s32.totalorder %s19, 1
    %p84 = por %p82, %p83
    %p86 = scmp.ne.s32.totalorder %s71, %s85
    %p87 = scmp.eq.s32.totalorder %s19, 0
    %p88 = por %p86, %p87
    %s90 = sadd.s32 %s89, 1
    %p93 = scmp.eq.s32.totalorder %s13, 1
    %p94 = scmp.ne.s32.totalorder %s89, %s91
    %p95 = scmp.eq.s32.totalorder %s13, 0
    %p96 = por %p94, %p95
    %p97 = scmp.ne.s32.totalorder %s89, %s91
    %p98 = scmp.eq.s32.totalorder %s18, 1
    %p99 = por %p97, %p98
    %p100 = scmp.ne.s32.totalorder %s91, %s92
    %p101 = scmp.eq.s32.totalorder %s18, 0
    %p102 = por %p100, %p101
    %p103 = scmp.ne.s32.totalorder %s91, %s92
    %p104 = scmp.eq.s32.totalorder %s19, 1
    %p105 = por %p103, %p104
    %p107 = scmp.ne.s32.totalorder %s92, %s106
    %p108 = scmp.eq.s32.totalorder %s19, 0
    %p109 = por %p107, %p108
    %s111 = sadd.s32 %s110, 1
    %p114 = scmp.eq.s32.totalorder %s13, 1
    %p115 = scmp.ne.s32.totalorder %s110, %s112
    %p116 = scmp.eq.s32.totalorder %s13, 0
    %p117 = por %p115, %p116
    %p118 = scmp.ne.s32.totalorder %s110, %s112
    %p119 = scmp.eq.s32.totalorder %s18, 1
    %p120 = por %p118, %p119
    %p121 = scmp.ne.s32.totalorder %s112, %s113
    %p122 = scmp.eq.s32.totalorder %s18, 0
    %p123 = por %p121, %p122
    %p124 = scmp.ne.s32.totalorder %s112, %s113
    %p125 = scmp.eq.s32.totalorder %s19, 1
    %p126 = por %p124, %p125
    %p128 = scmp.ne.s32.totalorder %s113, %s127
    %p129 = scmp.eq.s32.totalorder %s19, 0
    %p130 = por %p128, %p129
    %s132 = sadd.s32 %s131, 1
    %p135 = scmp.eq.s32.totalorder %s13, 1
    %p136 = scmp.ne.s32.totalorder %s131, %s133
    %p137 = scmp.eq.s32.totalorder %s13, 0
    %p138 = por %p136, %p137
    %p139 = scmp.ne.s32.totalorder %s131, %s133
    %p140 = scmp.eq.s32.totalorder %s18, 1
    %p141 = por %p139, %p140
    %p142 = scmp.ne.s32.totalorder %s133, %s134
    %p143 = scmp.eq.s32.totalorder %s18, 0
    %p144 = por %p142, %p143
    %p145 = scmp.ne.s32.totalorder %s133, %s134
    %p146 = scmp.eq.s32.totalorder %s19, 1
    %p147 = por %p145, %p146
    %p149 = scmp.ne.s32.totalorder %s134, %s148
    %p150 = scmp.eq.s32.totalorder %s19, 0
    %p151 = por %p149, %p150
    %s153 = sadd.s32 %s152, 1
    %p156 = scmp.eq.s32.totalorder %s13, 1
    %p157 = scmp.ne.s32.totalorder %s152, %s154
    %p158 = scmp.eq.s32.totalorder %s13, 0
    %p159 = por %p157, %p158
    %p160 = scmp.ne.s32.totalorder %s152, %s154
    %p161 = scmp.eq.s32.totalorder %s18, 1
    %p162 = por %p160, %p161
    %p163 = scmp.ne.s32.totalorder %s154, %s155
    %p164 = scmp.eq.s32.totalorder %s18, 0
    %p165 = por %p163, %p164
    %p166 = scmp.ne.s32.totalorder %s154, %s155
    %p167 = scmp.eq.s32.totalorder %s19, 1
    %p168 = por %p166, %p167
    %p170 = scmp.ne.s32.totalorder %s155, %s169
    %p171 = scmp.eq.s32.totalorder %s19, 0
    %p172 = por %p170, %p171
    %s173 = ssub.s32 %s13, %s20
    %p174 = scmp.eq.s32.totalorder %s173, 0
    %s176 = sadd.s32 %s175, 1
    %s177 = scalar_select %p174, %s175, %s176
    %p180 = pneg %p174
    %p181 = scmp.eq.s32.totalorder %s13, 1
    %p182 = por %p180, %p181
    %p183 = scmp.ne.s32.totalorder %s175, %s178
    %p184 = scmp.eq.s32.totalorder %s13, 0
    %p185 = por %p183, %p184
    %p186 = scmp.ne.s32.totalorder %s175, %s178
    %p187 = scmp.eq.s32.totalorder %s18, 1
    %p188 = por %p186, %p187
    %p189 = scmp.ne.s32.totalorder %s178, %s179
    %p190 = scmp.eq.s32.totalorder %s18, 0
    %p191 = por %p189, %p190
    %p192 = scmp.ne.s32.totalorder %s178, %s179
    %p193 = scmp.eq.s32.totalorder %s19, 1
    %p194 = por %p192, %p193
    %p196 = scmp.ne.s32.totalorder %s179, %s195
    %p197 = scmp.eq.s32.totalorder %s19, 0
    %p198 = por %p196, %p197
    %p199 = scmp.le.s32.totalorder 1, %s13
    %p200 = scmp.lt.s32.totalorder %s13, 3
    %p201 = pnand %p199, %p200
    %p202 = pneg %p201
    // Predicated region
    $region9: #{dqn_forward.1} parent=5 // pred_check
      _
    $region10: #{dqn_forward.1} parent=5 // pred_check_branch
      %204 = sbr.rel (%p201) target = $region12
    $region11: #{dqn_forward.1} parent=5 // pred_region
      %s205 = ssub.s32 %s13, 1
      // Predicated region
      $region13: #{dqn_forward.1} parent=11 // pred_check
        %p206 = pneg %p60
      $region14: #{dqn_forward.1} parent=11 // pred_check_branch
        %208 = sbr.rel (%p206) target = $region16
      $region15: #{dqn_forward.1} parent=11 // pred_region
        _
      $region16: #{dqn_forward.1} parent=11 // pred_fallthru
        _
      // Predicated region
      $region17: #{dqn_forward.1} parent=11 // pred_check
        %p209 = pneg %p81
      $region18: #{dqn_forward.1} parent=11 // pred_check_branch
        %211 = sbr.rel (%p209) target = $region20
      $region19: #{dqn_forward.1} parent=11 // pred_region
        _
      $region20: #{dqn_forward.1} parent=11 // pred_fallthru
        _
      // Predicated region
      $region21: #{dqn_forward.1} parent=11 // pred_check
        %p212 = pneg %p102
      $region22: #{dqn_forward.1} parent=11 // pred_check_branch
        %214 = sbr.rel (%p212) target = $region24
      $region23: #{dqn_forward.1} parent=11 // pred_region
        _
      $region24: #{dqn_forward.1} parent=11 // pred_fallthru
        _
      // Predicated region
      $region25: #{dqn_forward.1} parent=11 // pred_check
        %p215 = pneg %p123
      $region26: #{dqn_forward.1} parent=11 // pred_check_branch
        %217 = sbr.rel (%p215) target = $region28
      $region27: #{dqn_forward.1} parent=11 // pred_region
        _
      $region28: #{dqn_forward.1} parent=11 // pred_fallthru
        _
      // Predicated region
      $region29: #{dqn_forward.1} parent=11 // pred_check
        %p218 = pneg %p144
      $region30: #{dqn_forward.1} parent=11 // pred_check_branch
        %220 = sbr.rel (%p218) target = $region32
      $region31: #{dqn_forward.1} parent=11 // pred_region
        _
      $region32: #{dqn_forward.1} parent=11 // pred_fallthru
        _
      // Predicated region
      $region33: #{dqn_forward.1} parent=11 // pred_check
        %p221 = pneg %p165
      $region34: #{dqn_forward.1} parent=11 // pred_check_branch
        %223 = sbr.rel (%p221) target = $region36
      $region35: #{dqn_forward.1} parent=11 // pred_region
        _
      $region36: #{dqn_forward.1} parent=11 // pred_fallthru
        _
    $region12: #{dqn_forward.1} parent=5 // pred_fallthru
      _
    %p224 = scmp.lt.s32.totalorder %s13, 2
    // Predicated region
    $region37: #{dqn_forward.1} parent=5 // pred_check
      %p225 = pneg %p224
    $region38: #{dqn_forward.1} parent=5 // pred_check_branch
      %227 = sbr.rel (%p225) target = $region40
    $region39: #{dqn_forward.1} parent=5 // pred_region
      // Predicated region
      $region41: #{dqn_forward.1} parent=39 // pred_check
        %p228 = pneg %p33
      $region42: #{dqn_forward.1} parent=39 // pred_check_branch
        %230 = sbr.rel (%p228) target = $region44
      $region43: #{dqn_forward.1} parent=39 // pred_region
        %s231 = smul.u32 4, %s13
        %p232 = scmp.lt.s32.totalorder %s231, 7
        %s233 = scalar_select %p232, %s231, 7
        %s234 = smul.addr %s233, 8
        %s235 = scalar_lea.vmem %s0, %s234
        %s236 = smul.u32 4, %s13
      $region44: #{dqn_forward.1} parent=39 // pred_fallthru
        _
    $region40: #{dqn_forward.1} parent=5 // pred_fallthru
      _
    %p237 = scmp.le.s32.totalorder 1, %s13
    %p238 = scmp.lt.s32.totalorder %s13, 3
    %p239 = pnand %p237, %p238
    %p240 = pneg %p239
    // Predicated region
    $region45: #{dqn_forward.1} parent=5 // pred_check
      _
    $region46: #{dqn_forward.1} parent=5 // pred_check_branch
      %242 = sbr.rel (%p239) target = $region48
    $region47: #{dqn_forward.1} parent=5 // pred_region
      %s243 = ssub.s32 %s13, 1
      %s244 = smul.u32 4, %s18
      %p245 = scmp.lt.s32.totalorder %s244, 7
      %s246 = scalar_select %p245, %s244, 7
      %s247 = smul.addr %s246, 8
      %s248 = scalar_lea.vmem %s0, %s247
      %p249 = pneg %p39
      %p250 = pneg %p36
      %p251 = pneg %p60
      %p252 = pneg %p57
      %p253 = pneg %p81
      %p254 = pneg %p78
      %p255 = pneg %p102
      %p256 = pneg %p99
      %p257 = pneg %p123
      %p258 = pneg %p120
      %p259 = pneg %p144
      %p260 = pneg %p141
      %p261 = pneg %p165
      %p262 = pneg %p162
      %p263 = pneg %p191
      %p264 = pneg %p188
      %s265 = smul.u32 4, %s18
      %p266 = scmp.lt.s32.totalorder %s265, 7
      %s267 = scalar_select %p266, %s265, 7
      %s268 = smul.addr %s267, 8
      %s269 = scalar_lea.vmem %s7, %s268
      %s270 = smul.u32 4, %s18
      %p271 = scmp.lt.s32.totalorder %s270, 7
      %s272 = scalar_select %p271, %s270, 7
      %s273 = smul.addr %s272, 8
      %s274 = scalar_lea.vmem %s0, %s273
      %s275 = smul.u32 4, %s18
      %s276 = smul.u32 4, %s18
      %p277 = scmp.lt.s32.totalorder %s276, 7
      %s278 = scalar_select %p277, %s276, 7
      %s279 = smul.addr %s278, 8
      %s280 = scalar_lea.vmem %s7, %s279
      %s281 = smul.u32 4, %s18
      %v282 = vld [vmem:[%s274] sm:$0xff]
      %v283 = vld [vmem:[%s274 + $0x8] sm:$0xff]
      %v284 = vld [vmem:[%s274 + $0x10] sm:$0xff]
      %v285 = vld [vmem:[%s274 + $0x18] sm:$0xff]
      %v286 = vld [vmem:[%s1] sm:$0xf]
      %v287 = vld [vmem:[%s2] sm:$0x1]
      %v289 = vlaneseq
      %v290 = vshrl.u32 %v289, 7
      %v291 = vsub.s32 0, %v290
      %v292 = vrot.slane %v287, %v291
      %vm294 = vcmask 31744
      %v296 = vsel %vm294, %v282, 0
      %v299 = vsel %vm294, %v283, 0
      %v302 = vsel %vm294, %v284, 0
      %v305 = vsel %vm294, %v285, 0
      %vm307 = vcmask 1043456
      %v309 = vsel %vm307, %v286, 0
      %311 = vmatprep.subr.mxu0 0.0
      %312 = vmatpush1.msra.mxu0 0.0
      %313 = vmatprep.subr.mxu0 0.0
      %314 = vmatpush1.msra.mxu0 0.0
      %315 = vmatprep.subr.mxu0 0.0
      %316 = vmatpush1.msra.mxu0 0.0
      %317 = vmatprep.subr.mxu0 0.0
      %318 = vmatpush1.msra.mxu0 0.0
      %319 = vmatprep.subr.mxu0 0.0
      %320 = vmatpush1.msra.mxu0 0.0
      %321 = vmatprep.subr.mxu0 0.0
      %322 = vmatpush1.msra.mxu0 0.0
      %323 = vmatprep.subr.mxu0 0.0
      %324 = vmatpush1.msra.mxu0 0.0
      %325 = vmatprep.subr.mxu0 0.0
      %326 = vmatpush1.msra.mxu0 0.0
      %327 = vmatprep.subr.mxu0 0.0
      %328 = vmatpush1.msra.mxu0 0.0
      %329 = vmatprep.subr.mxu0 0.0
      %330 = vmatpush1.msra.mxu0 0.0
      %331 = vmatprep.subr.mxu0 0.0
      %332 = vmatpush1.msra.mxu0 0.0
      %333 = vmatprep.subr.mxu0 0.0
      %334 = vmatpush1.msra.mxu0 0.0
      %335 = vmatprep.subr.mxu0 0.0
      %336 = vmatpush1.msra.mxu0 0.0
      %337 = vmatprep.subr.mxu0 0.0
      %338 = vmatpush1.msra.mxu0 0.0
      %339 = vmatprep.subr.mxu0 0.0
      %340 = vmatpush1.msra.mxu0 0.0
      %341 = vmatprep.subr.mxu0 0.0
      %342 = vmatpush1.msra.mxu0 %v309
      %343 = vmatprep.subr.mxu0 0.0
      %344 = vmatpush2.msra.mxu0 0.0
      %345 = vmatprep.subr.mxu0 0.0
      %346 = vmatpush2.msra.mxu0 0.0
      %347 = vmatprep.subr.mxu0 0.0
      %348 = vmatpush2.msra.mxu0 0.0
      %349 = vmatprep.subr.mxu0 0.0
      %350 = vmatpush2.msra.mxu0 0.0
      %351 = vmatprep.subr.mxu0 0.0
      %352 = vmatpush2.msra.mxu0 0.0
      %353 = vmatprep.subr.mxu0 0.0
      %354 = vmatpush2.msra.mxu0 0.0
      %355 = vmatprep.subr.mxu0 0.0
      %356 = vmatpush2.msra.mxu0 0.0
      %357 = vmatprep.subr.mxu0 0.0
      %358 = vmatpush2.msra.mxu0 0.0
      %359 = vmatprep.subr.mxu0 0.0
      %360 = vmatpush2.msra.mxu0 0.0
      %361 = vmatprep.subr.mxu0 0.0
      %362 = vmatpush2.msra.mxu0 0.0
      %363 = vmatprep.subr.mxu0 0.0
      %364 = vmatpush2.msra.mxu0 0.0
      %365 = vmatprep.subr.mxu0 0.0
      %366 = vmatpush2.msra.mxu0 0.0
      %367 = vmatprep.subr.mxu0 0.0
      %368 = vmatpush2.msra.mxu0 0.0
      %369 = vmatprep.subr.mxu0 0.0
      %370 = vmatpush2.msra.mxu0 0.0
      %371 = vmatprep.subr.mxu0 0.0
      %372 = vmatpush2.msra.mxu0 0.0
      %373 = vmatprep.subr.mxu0 0.0
      %374 = vmatpush2.msra.mxu0 0.0
      %375 = vmatprep.mubr.f32.mxu0 0.0
      %376 = vmatmul.mubr.f32.gmra.mxu0 %v296
      %v377 = vpop.f32.mrf.mxu0
      %v378 = vadd.f32 %v292, %v377
      %v379 = vpop.f32.mrf.mxu0
      %380 = vmatprep.mubr.f32.mxu0 0.0
      %381 = vmatmul.mubr.f32.gmra.mxu0 %v299
      %v382 = vpop.f32.mrf.mxu0
      %v383 = vadd.f32 %v292, %v382
      %v384 = vpop.f32.mrf.mxu0
      %385 = vmatprep.mubr.f32.mxu0 0.0
      %386 = vmatmul.mubr.f32.gmra.mxu0 %v302
      %v387 = vpop.f32.mrf.mxu0
      %v388 = vadd.f32 %v292, %v387
      %v389 = vpop.f32.mrf.mxu0
      %390 = vmatprep.mubr.f32.mxu0 0.0
      %391 = vmatmul.mubr.f32.gmra.mxu0 %v305
      %v392 = vpop.f32.mrf.mxu0
      %v393 = vadd.f32 %v292, %v392
      %v394 = vpop.f32.mrf.mxu0
      %395 = vdwg.mxu0
      %v396 = vmax.f32 %v378, 0.0
      %v397 = vmax.f32 %v383, 0.0
      %v398 = vmax.f32 %v388, 0.0
      %v399 = vmax.f32 %v393, 0.0
      %v400 = vld [vmem:[%s3] sm:$0xff]
      %v401 = vld [vmem:[%s3 + $0x8] sm:$0xff]
      %v402 = vld [vmem:[%s3 + $0x10] sm:$0xff]
      %v403 = vld [vmem:[%s3 + $0x18] sm:$0xff]
      %v404 = vld [vmem:[%s3 + $0x20] sm:$0xff]
      %v405 = vld [vmem:[%s3 + $0x28] sm:$0xff]
      %v406 = vld [vmem:[%s3 + $0x30] sm:$0xff]
      %v407 = vld [vmem:[%s3 + $0x38] sm:$0xff]
      %v408 = vld [vmem:[%s4] sm:$0x1]
      %v410 = vlaneseq
      %v411 = vshrl.u32 %v410, 7
      %v412 = vsub.s32 0, %v411
      %v413 = vrot.slane %v408, %v412
      %vm415 = vcmask 523264
      %v417 = vsel %vm415, %v396, 0
      %v420 = vsel %vm415, %v397, 0
      %v423 = vsel %vm415, %v398, 0
      %v426 = vsel %vm415, %v399, 0
      %428 = vmatprep.subr.mxu0 0.0
      %429 = vmatpush1.msra.mxu0 0.0
      %430 = vmatprep.subr.mxu0 0.0
      %431 = vmatpush1.msra.mxu0 0.0
      %432 = vmatprep.subr.mxu0 0.0
      %433 = vmatpush1.msra.mxu0 0.0
      %434 = vmatprep.subr.mxu0 0.0
      %435 = vmatpush1.msra.mxu0 0.0
      %436 = vmatprep.subr.mxu0 0.0
      %437 = vmatpush1.msra.mxu0 0.0
      %438 = vmatprep.subr.mxu0 0.0
      %439 = vmatpush1.msra.mxu0 0.0
      %440 = vmatprep.subr.mxu0 0.0
      %441 = vmatpush1.msra.mxu0 0.0
      %442 = vmatprep.subr.mxu0 0.0
      %443 = vmatpush1.msra.mxu0 0.0
      %444 = vmatprep.subr.mxu0 0.0
      %445 = vmatpush1.msra.mxu0 %v407
      %446 = vmatprep.subr.mxu0 0.0
      %447 = vmatpush1.msra.mxu0 %v406
      %448 = vmatprep.subr.mxu0 0.0
      %449 = vmatpush1.msra.mxu0 %v405
      %450 = vmatprep.subr.mxu0 0.0
      %451 = vmatpush1.msra.mxu0 %v404
      %452 = vmatprep.subr.mxu0 0.0
      %453 = vmatpush1.msra.mxu0 %v403
      %454 = vmatprep.subr.mxu0 0.0
      %455 = vmatpush1.msra.mxu0 %v402
      %456 = vmatprep.subr.mxu0 0.0
      %457 = vmatpush1.msra.mxu0 %v401
      %458 = vmatprep.subr.mxu0 0.0
      %459 = vmatpush1.msra.mxu0 %v400
      %460 = vmatprep.subr.mxu0 0.0
      %461 = vmatpush2.msra.mxu0 0.0
      %462 = vmatprep.subr.mxu0 0.0
      %463 = vmatpush2.msra.mxu0 0.0
      %464 = vmatprep.subr.mxu0 0.0
      %465 = vmatpush2.msra.mxu0 0.0
      %466 = vmatprep.subr.mxu0 0.0
      %467 = vmatpush2.msra.mxu0 0.0
      %468 = vmatprep.subr.mxu0 0.0
      %469 = vmatpush2.msra.mxu0 0.0
      %470 = vmatprep.subr.mxu0 0.0
      %471 = vmatpush2.msra.mxu0 0.0
      %472 = vmatprep.subr.mxu0 0.0
      %473 = vmatpush2.msra.mxu0 0.0
      %474 = vmatprep.subr.mxu0 0.0
      %475 = vmatpush2.msra.mxu0 0.0
      %476 = vmatprep.subr.mxu0 0.0
      %477 = vmatpush2.msra.mxu0 0.0
      %478 = vmatprep.subr.mxu0 0.0
      %479 = vmatpush2.msra.mxu0 0.0
      %480 = vmatprep.subr.mxu0 0.0
      %481 = vmatpush2.msra.mxu0 0.0
      %482 = vmatprep.subr.mxu0 0.0
      %483 = vmatpush2.msra.mxu0 0.0
      %484 = vmatprep.subr.mxu0 0.0
      %485 = vmatpush2.msra.mxu0 0.0
      %486 = vmatprep.subr.mxu0 0.0
      %487 = vmatpush2.msra.mxu0 0.0
      %488 = vmatprep.subr.mxu0 0.0
      %489 = vmatpush2.msra.mxu0 0.0
      %490 = vmatprep.subr.mxu0 0.0
      %491 = vmatpush2.msra.mxu0 0.0
      %492 = vmatprep.mubr.f32.mxu0 0.0
      %493 = vmatmul.mubr.f32.gmra.mxu0 %v417
      %v494 = vpop.f32.mrf.mxu0
      %v495 = vadd.f32 %v413, %v494
      %v496 = vpop.f32.mrf.mxu0
      %497 = vmatprep.mubr.f32.mxu0 0.0
      %498 = vmatmul.mubr.f32.gmra.mxu0 %v420
      %v499 = vpop.f32.mrf.mxu0
      %v500 = vadd.f32 %v413, %v499
      %v501 = vpop.f32.mrf.mxu0
      %502 = vmatprep.mubr.f32.mxu0 0.0
      %503 = vmatmul.mubr.f32.gmra.mxu0 %v423
      %v504 = vpop.f32.mrf.mxu0
      %v505 = vadd.f32 %v413, %v504
      %v506 = vpop.f32.mrf.mxu0
      %507 = vmatprep.mubr.f32.mxu0 0.0
      %508 = vmatmul.mubr.f32.gmra.mxu0 %v426
      %v509 = vpop.f32.mrf.mxu0
      %v510 = vadd.f32 %v413, %v509
      %v511 = vpop.f32.mrf.mxu0
      %512 = vdwg.mxu0
      %v513 = vmax.f32 %v495, 0.0
      %v514 = vmax.f32 %v500, 0.0
      %v515 = vmax.f32 %v505, 0.0
      %v516 = vmax.f32 %v510, 0.0
      %v517 = vld [vmem:[%s5] sm:$0xff]
      %v518 = vld [vmem:[%s5 + $0x8] sm:$0xff]
      %v519 = vld [vmem:[%s5 + $0x10] sm:$0xff]
      %v520 = vld [vmem:[%s5 + $0x18] sm:$0xff]
      %v521 = vld [vmem:[%s5 + $0x20] sm:$0xff]
      %v522 = vld [vmem:[%s5 + $0x28] sm:$0xff]
      %v523 = vld [vmem:[%s5 + $0x30] sm:$0xff]
      %v524 = vld [vmem:[%s5 + $0x38] sm:$0xff]
      %v525 = vld [vmem:[%s6] sm:$0x1]
      %v527 = vlaneseq
      %v528 = vshrl.u32 %v527, 7
      %v529 = vsub.s32 0, %v528
      %v530 = vrot.slane %v525, %v529
      %v533 = vsel %vm415, %v513, 0
      %v536 = vsel %vm415, %v514, 0
      %v539 = vsel %vm415, %v515, 0
      %v542 = vsel %vm415, %v516, 0
      %544 = vmatprep.subr.mxu0 0.0
      %545 = vmatpush1.msra.mxu0 0.0
      %546 = vmatprep.subr.mxu0 0.0
      %547 = vmatpush1.msra.mxu0 0.0
      %548 = vmatprep.subr.mxu0 0.0
      %549 = vmatpush1.msra.mxu0 0.0
      %550 = vmatprep.subr.mxu0 0.0
      %551 = vmatpush1.msra.mxu0 0.0
      %552 = vmatprep.subr.mxu0 0.0
      %553 = vmatpush1.msra.mxu0 0.0
      %554 = vmatprep.subr.mxu0 0.0
      %555 = vmatpush1.msra.mxu0 0.0
      %556 = vmatprep.subr.mxu0 0.0
      %557 = vmatpush1.msra.mxu0 0.0
      %558 = vmatprep.subr.mxu0 0.0
      %559 = vmatpush1.msra.mxu0 0.0
      %560 = vmatprep.subr.mxu0 0.0
      %561 = vmatpush1.msra.mxu0 %v524
      %562 = vmatprep.subr.mxu0 0.0
      %563 = vmatpush1.msra.mxu0 %v523
      %564 = vmatprep.subr.mxu0 0.0
      %565 = vmatpush1.msra.mxu0 %v522
      %566 = vmatprep.subr.mxu0 0.0
      %567 = vmatpush1.msra.mxu0 %v521
      %568 = vmatprep.subr.mxu0 0.0
      %569 = vmatpush1.msra.mxu0 %v520
      %570 = vmatprep.subr.mxu0 0.0
      %571 = vmatpush1.msra.mxu0 %v519
      %572 = vmatprep.subr.mxu0 0.0
      %573 = vmatpush1.msra.mxu0 %v518
      %574 = vmatprep.subr.mxu0 0.0
      %575 = vmatpush1.msra.mxu0 %v517
      %576 = vmatprep.subr.mxu0 0.0
      %577 = vmatpush2.msra.mxu0 0.0
      %578 = vmatprep.subr.mxu0 0.0
      %579 = vmatpush2.msra.mxu0 0.0
      %580 = vmatprep.subr.mxu0 0.0
      %581 = vmatpush2.msra.mxu0 0.0
      %582 = vmatprep.subr.mxu0 0.0
      %583 = vmatpush2.msra.mxu0 0.0
      %584 = vmatprep.subr.mxu0 0.0
      %585 = vmatpush2.msra.mxu0 0.0
      %586 = vmatprep.subr.mxu0 0.0
      %587 = vmatpush2.msra.mxu0 0.0
      %588 = vmatprep.subr.mxu0 0.0
      %589 = vmatpush2.msra.mxu0 0.0
      %590 = vmatprep.subr.mxu0 0.0
      %591 = vmatpush2.msra.mxu0 0.0
      %592 = vmatprep.subr.mxu0 0.0
      %593 = vmatpush2.msra.mxu0 0.0
      %594 = vmatprep.subr.mxu0 0.0
      %595 = vmatpush2.msra.mxu0 0.0
      %596 = vmatprep.subr.mxu0 0.0
      %597 = vmatpush2.msra.mxu0 0.0
      %598 = vmatprep.subr.mxu0 0.0
      %599 = vmatpush2.msra.mxu0 0.0
      %600 = vmatprep.subr.mxu0 0.0
      %601 = vmatpush2.msra.mxu0 0.0
      %602 = vmatprep.subr.mxu0 0.0
      %603 = vmatpush2.msra.mxu0 0.0
      %604 = vmatprep.subr.mxu0 0.0
      %605 = vmatpush2.msra.mxu0 0.0
      %606 = vmatprep.subr.mxu0 0.0
      %607 = vmatpush2.msra.mxu0 0.0
      %608 = vmatprep.mubr.f32.mxu0 0.0
      %609 = vmatmul.mubr.f32.gmra.mxu0 %v533
      %v610 = vpop.f32.mrf.mxu0
      %v611 = vadd.f32 %v530, %v610
      %v612 = vpop.f32.mrf.mxu0
      %613 = vmatprep.mubr.f32.mxu0 0.0
      %614 = vmatmul.mubr.f32.gmra.mxu0 %v536
      %v615 = vpop.f32.mrf.mxu0
      %v616 = vadd.f32 %v530, %v615
      %v617 = vpop.f32.mrf.mxu0
      %618 = vmatprep.mubr.f32.mxu0 0.0
      %619 = vmatmul.mubr.f32.gmra.mxu0 %v539
      %v620 = vpop.f32.mrf.mxu0
      %v621 = vadd.f32 %v530, %v620
      %v622 = vpop.f32.mrf.mxu0
      %623 = vmatprep.mubr.f32.mxu0 0.0
      %624 = vmatmul.mubr.f32.gmra.mxu0 %v542
      %v625 = vpop.f32.mrf.mxu0
      %v626 = vadd.f32 %v530, %v625
      %v627 = vpop.f32.mrf.mxu0
      %628 = vdwg.mxu0
      %vm629 = vcmask 89088
      %630 = vst.msk [vmem:[%s280] sm:$0xff] %vm629, %v611
      %631 = vst.msk [vmem:[%s280 + $0x8] sm:$0xff] %vm629, %v616
      %632 = vst.msk [vmem:[%s280 + $0x10] sm:$0xff] %vm629, %v621
      %633 = vst.msk [vmem:[%s280 + $0x18] sm:$0xff] %vm629, %v626
      %s634 = smul.u32 4, %s18
      %p635 = scmp.lt.s32.totalorder %s634, 7
      %s636 = scalar_select %p635, %s634, 7
      %s637 = smul.addr %s636, 8
      %s638 = scalar_lea.vmem %s7, %s637
      // Predicated region
      $region49: #{dqn_forward.1} parent=47 // pred_check
        %p639 = pneg %p188
      $region50: #{dqn_forward.1} parent=47 // pred_check_branch
        %641 = sbr.rel (%p639) target = $region52
      $region51: #{dqn_forward.1} parent=47 // pred_region
        %s642 = smul.u32 4, %s18
      $region52: #{dqn_forward.1} parent=47 // pred_fallthru
        _
    $region48: #{dqn_forward.1} parent=5 // pred_fallthru
      _
    %p643 = scmp.le.s32.totalorder 2, %s13
    // Predicated region
    $region53: #{dqn_forward.1} parent=5 // pred_check
      %p644 = pneg %p643
    $region54: #{dqn_forward.1} parent=5 // pred_check_branch
      %646 = sbr.rel (%p644) target = $region56
    $region55: #{dqn_forward.1} parent=5 // pred_region
      %s647 = ssub.s32 %s13, 2
      // Predicated region
      $region57: #{dqn_forward.1} parent=55 // pred_check
        %p648 = pneg %p194
      $region58: #{dqn_forward.1} parent=55 // pred_check_branch
        %650 = sbr.rel (%p648) target = $region60
      $region59: #{dqn_forward.1} parent=55 // pred_region
        %s651 = smul.u32 4, %s19
        %p652 = scmp.lt.s32.totalorder %s651, 7
        %s653 = scalar_select %p652, %s651, 7
        %s654 = smul.addr %s653, 8
        %s655 = scalar_lea.vmem %s7, %s654
      $region60: #{dqn_forward.1} parent=55 // pred_fallthru
        _
    $region56: #{dqn_forward.1} parent=5 // pred_fallthru
      _
  $region6: #{dqn_forward.1} parent=0 // loop_footer
    %s17 = sadd.s32 1, %s13
  $region7: #{dqn_forward.1} parent=0 // loop_footer_branch
    %12 = sbr.rel target = $region3
  $region8: #{dqn_forward.1} parent=0 // loop_exit
    _

</llo_original>
